<compile_context>
chip_gen: v7x
topology: tpu7x:2x2x1
jax: 0.10.0
libtpu: 0.0.40
codegen_flags: <defaults>
</compile_context>

<pallas_src>
import functools

import numpy as np
import jax
import jax.numpy as jnp
from jax.experimental import pallas as pl
from jax.experimental.pallas import tpu as pltpu


def _round_up(x: int, m: int) -> int:
    return ((x + m - 1) // m) * m


def action_net_kernel(x_ref, w_ref, b_ref, o_ref, *, o_cols):
    # x_ref: (TB, D)      latent_pi tile (f32, or bf16 if trunk emits bf16)
    # w_ref: (D, O_pad)   effective weight = W.T @ S   (lane-aligned columns)
    # b_ref: (1, O_pad)   effective bias   = b @ S     (f32; bias add stays f32)
    # o_ref: (TB, o_cols) UNPADDED mean_actions tile
    x = x_ref[...]
    if x.dtype != w_ref.dtype:
        # In-kernel cast (free VPU op) instead of a separate XLA astype of x.
        x = x.astype(w_ref.dtype)
    acc = jnp.dot(x, w_ref[...], preferred_element_type=jnp.float32)
    o_ref[...] = (acc + b_ref[...])[:, :o_cols].astype(o_ref.dtype)


def precompute_effective_params(weight, bias, out_base_idx, out_transfer_idx,
                                output_size, *, compute_dtype=jnp.float32):
    """One-time (module-construction) glue: fold the Linear transpose, bias
    and the masked column scatter into an effective (D, O_pad) weight and
    (1, O_pad) bias. Columns are padded to a multiple of 128 only so the MXU
    operand is lane-aligned; the kernel never writes the padded columns."""
    A, D = weight.shape
    O = int(output_size)
    O_pad = _round_up(max(O, 128), 128)

    base_idx = np.asarray(out_base_idx)
    transfer_idx = np.asarray(out_transfer_idx)
    # Scatter-as-matmul sums duplicate targets; PyTorch indexed assignment is
    # last-write-wins. Boolean-mask-derived indices are unique, but verify.
    assert len(base_idx) == len(transfer_idx)
    assert len(np.unique(base_idx)) == len(base_idx), \
        "out_base_idx must be unique (boolean-mask semantics)"
    assert base_idx.size == 0 or (base_idx.min() >= 0 and base_idx.max() < O), \
        "out_base_idx out of range for output_size"
    assert transfer_idx.size == 0 or (transfer_idx.min() >= 0 and transfer_idx.max() < A), \
        "out_transfer_idx out of range for base_action_net output"

    # 0/1 selection matrix realizing mean_actions[:, base] = base_out[:, transfer]
    sel = jnp.zeros((A, O_pad), jnp.float32).at[
        jnp.asarray(transfer_idx), jnp.asarray(base_idx)].set(1.0)

    # Fold selection in f32 first, then cast (selection of values is exact).
    w_eff = (weight.astype(jnp.float32).T @ sel).astype(compute_dtype)  # (D, O_pad)
    b_eff = (bias.astype(jnp.float32) @ sel).reshape(1, O_pad)          # (1, O_pad), f32
    return w_eff, b_eff


def action_net_wrapper_forward(latent_pi, w_eff, b_eff, output_size, *,
                               single_shot_max_b=256, max_tile_b=4096,
                               out_dtype=jnp.float32):
    """mean_actions = latent_pi @ W_eff + b_eff, emitted directly as
    (B, output_size) — no padding of x, no external output slice."""
    B, D = latent_pi.shape
    O_pad = w_eff.shape[1]
    O = int(output_size)
    kernel = functools.partial(action_net_kernel, o_cols=O)
    out_bytes = jnp.dtype(out_dtype).itemsize

    def cost(rows):
        bytes_acc = (rows * D * latent_pi.dtype.itemsize
                     + D * O_pad * w_eff.dtype.itemsize
                     + O_pad * 4
                     + rows * O * out_bytes)
        return pl.CostEstimate(flops=2 * rows * D * O_pad,
                               bytes_accessed=bytes_acc,
                               transcendentals=0)

    if B <= single_shot_max_b:
        # Latency path: single invocation, no grid / pipeline machinery.
        return pl.pallas_call(
            kernel,
            out_shape=jax.ShapeDtypeStruct((B, O), out_dtype),
            in_specs=[pl.BlockSpec(memory_space=pltpu.MemorySpace.VMEM)] * 3,
            out_specs=pl.BlockSpec(memory_space=pltpu.MemorySpace.VMEM),
            cost_estimate=cost(B),
        )(latent_pi, w_eff, b_eff)

    # Throughput path: pipelined grid over rows. Tile size:
    #   * at most max_tile_b (amortizes ~0.35us/step overhead),
    #   * at most a conservative VMEM budget (fits v7x's 32 MiB scoped default
    #     with double-buffered x/out tiles + resident weight, no override),
    #   * at most ceil(B/2) so there are always >= 2 "parallel" grid steps
    #     (both TensorCores on v7x get work for mid-size batches).
    vmem_budget = 12 * 1024 * 1024
    per_row = 2 * (D * latent_pi.dtype.itemsize + O * out_bytes)
    tb_cap = max(8, (vmem_budget // per_row) // 8 * 8)
    tb_half = _round_up(-(-B // 2), 8)
    TB = max(8, min(max_tile_b, tb_cap, tb_half))

    return pl.pallas_call(
        kernel,
        out_shape=jax.ShapeDtypeStruct((B, O), out_dtype),
        grid=(pl.cdiv(B, TB),),              # ragged last block handled by Pallas
        in_specs=[pl.BlockSpec((TB, D), lambda i: (i, 0)),
                  pl.BlockSpec((D, O_pad), lambda i: (0, 0)),
                  pl.BlockSpec((1, O_pad), lambda i: (0, 0))],
        out_specs=pl.BlockSpec((TB, O), lambda i: (i, 0)),
        compiler_params=pltpu.CompilerParams(
            dimension_semantics=("parallel",)),
        cost_estimate=cost(B),
    )(latent_pi, w_eff, b_eff)


if __name__ == "__main__":
    # Small, deterministic setup consistent with the module:
    #   base_action_net = nn.Linear(latent_dim, base_action_dim)
    batch = 8
    latent_dim = 32
    base_action_dim = 6
    output_size = 10

    key = jax.random.PRNGKey(0)
    k_x, k_w, k_b, k_x2 = jax.random.split(key, 4)

    latent_pi = jax.random.normal(k_x, (batch, latent_dim), jnp.float32)
    weight = jax.random.normal(k_w, (base_action_dim, latent_dim), jnp.float32) * 0.1
    bias = jax.random.normal(k_b, (base_action_dim,), jnp.float32) * 0.1

    # Masks: 4 of the base-net outputs are routed into 4 slots of the
    # (zero-initialized) full-size action vector.
    out_transfer_idx = np.array([0, 2, 3, 5], dtype=np.int32)  # cols of base output
    out_base_idx = np.array([1, 4, 6, 9], dtype=np.int32)      # cols of mean_actions

    # One-time static glue (module construction), not on the per-step path.
    # (compute_dtype=jnp.bfloat16 enables the bf16-MXU path on v5e/v6e/v7x;
    #  x is then cast inside the kernel, not in the wrapper.)
    w_eff, b_eff = precompute_effective_params(
        weight, bias, out_base_idx, out_transfer_idx, output_size,
        compute_dtype=jnp.float32)

    fwd = jax.jit(functools.partial(action_net_wrapper_forward,
                                    output_size=output_size))

    # Pure-JAX reference (mirrors the PyTorch indexed assignment).
    def ref_fn(x):
        base = x @ weight.T + bias
        r = jnp.zeros((x.shape[0], output_size), jnp.float32)
        return r.at[:, out_base_idx].set(base[:, out_transfer_idx])

    # Latency (single-shot) path.
    out = jax.block_until_ready(fwd(latent_pi, w_eff, b_eff))
    assert out.shape == (batch, output_size)
    assert jnp.allclose(out, ref_fn(latent_pi), atol=1e-5, rtol=1e-5), \
        "small-batch mismatch vs reference"

    # Throughput (pipelined grid) path: 2 parallel steps + ragged last block.
    latent_big = jax.random.normal(k_x2, (300, latent_dim), jnp.float32)
    out_big = jax.block_until_ready(fwd(latent_big, w_eff, b_eff))
    assert out_big.shape == (300, output_size)
    assert jnp.allclose(out_big, ref_fn(latent_big), atol=1e-5, rtol=1e-5), \
        "grid-path mismatch vs reference"

    print("KERNEL_OK")
</pallas_src>

<mosaic_0001>
module attributes {stable_mosaic.version = 11 : i64} {
  func.func @action_net_kernel(%arg0: memref<8x32xf32, #tpu.memory_space<vmem>>, %arg1: memref<32x128xf32, #tpu.memory_space<vmem>>, %arg2: memref<1x128xf32, #tpu.memory_space<vmem>>, %arg3: memref<8x10xf32, #tpu.memory_space<vmem>>) attributes {dimension_semantics = [], scalar_prefetch = 0 : i64, scratch_operands = 0 : i64, tpu.core_type = #tpu.core_type<tc>} {
    %c0 = arith.constant 0 : index
    %c0_0 = arith.constant 0 : index
    %0 = vector.load %arg0[%c0, %c0_0] : memref<8x32xf32, #tpu.memory_space<vmem>>, vector<8x32xf32>
    %c0_1 = arith.constant 0 : index
    %c0_2 = arith.constant 0 : index
    %1 = vector.load %arg1[%c0_1, %c0_2] : memref<32x128xf32, #tpu.memory_space<vmem>>, vector<32x128xf32>
    %cst = arith.constant dense<0.000000e+00> : vector<8x128xf32>
    %2 = tpu.matmul %0, %1, %cst {dimension_numbers = #tpu.dot_dimension_numbers<[1], [0], [0], [1], [0, 0, 1, 1], [], []>} : vector<8x32xf32>, vector<32x128xf32>, vector<8x128xf32> -> vector<8x128xf32>
    %c0_3 = arith.constant 0 : index
    %c0_4 = arith.constant 0 : index
    %3 = vector.load %arg2[%c0_3, %c0_4] : memref<1x128xf32, #tpu.memory_space<vmem>>, vector<1x128xf32>
    %4 = vector.broadcast %3 : vector<1x128xf32> to vector<8x128xf32>
    %5 = arith.addf %2, %4 : vector<8x128xf32>
    %6 = vector.extract_strided_slice %5 {offsets = [0, 0], sizes = [8, 10], strides = [1, 1]} : vector<8x128xf32> to vector<8x10xf32>
    %c0_5 = arith.constant 0 : index
    %c0_6 = arith.constant 0 : index
    %7 = vector.load %arg3[%c0_5, %c0_6] : memref<8x10xf32, #tpu.memory_space<vmem>>, vector<8x10xf32>
    tpu.vector_store %arg3[%c0_5, %c0_6], %6 {strides = array<i32>} : memref<8x10xf32, #tpu.memory_space<vmem>>, vector<8x10xf32>,
    return
  }
}

</mosaic_0001>

<llo_original>
// kernel: action_net_wrapper_forward.1
$region0: #{action_net_wrapper_forward.1}
  #allocation0 [shape = 'u32[]', space=smem, size = 0x4, offset = 0x4, fixed_abs, tag = 'smem constant byte address 0x4 - core index']
  #allocation1 [shape = 'u32[144,128]{1,0:T(1,128)}', space=vmem, size = 0x12000, scoped, tag = 'internal scratch']
  %s0 = inlined_call_operand.hbm [shape: f32[8,32], index: 0, kind: input, shape index: {}]
  %s1 = inlined_call_operand.hbm [shape: f32[32,128], index: 1, kind: input, shape index: {}]
  %s2 = inlined_call_operand.vmem [shape: f32[1,128], index: 2, kind: input, shape index: {}]
  %s3 = inlined_call_operand.hbm [shape: f32[8,10], index: 3, kind: output, shape index: {}]
  %s4 = sld [smem:[#allocation0]]
  $region30: #{action_net_wrapper_forward.1} parent=0
    _
  %s6 = ssub.s32 1, %s4
  %s7 = scalar_select 0, %s6, %s4
  $region1: #{action_net_wrapper_forward.1} parent=0
    #allocation2 [shape = 'u8[4096]{0}', space=vmem, size = 0x1000, scoped, tag = 'input window, operand 0, single buffered']
    #allocation3 [shape = 's32[1]{0}', space=sflag, size = 0x4, scoped, tag = 'scoped memory for action_net_wrapper_forward.1']
    #allocation4 [shape = 's32[1]{0}', space=sflag, size = 0x4, scoped, tag = 'scoped memory for action_net_wrapper_forward.1']
    #allocation5 [shape = 'u8[16384]{0}', space=vmem, size = 0x4000, scoped, tag = 'input window, operand 1, single buffered']
    #allocation6 [shape = 's32[1]{0}', space=sflag, size = 0x4, scoped, tag = 'scoped memory for action_net_wrapper_forward.1']
    #allocation7 [shape = 'u8[4096]{0}', space=vmem, size = 0x1000, scoped, tag = 'output window, operand 0, single buffered']
    %8 = vsyncpa [#allocation3], 0
    %9 = vsyncpa [#allocation6], 0
    %10 = vsyncpa [#allocation4], 0
    // Predicated region
    $region2: #{action_net_wrapper_forward.1} parent=1 // pred_check
      _
    $region3: #{action_net_wrapper_forward.1} parent=1 // pred_check_branch
      %12 = sbr.rel (0) target = $region5
    $region4: #{action_net_wrapper_forward.1} parent=1 // pred_region
      %s14 = ssub.s32 128, 128
      %15 = vsyncadd [#allocation3], %s14
      %s17 = sshll.u32 [#allocation2], 4
      %s18 = int_to_ptr.vmem [resolvable:$true] %s17
      %20 = dma.hbm_to_vmem [thread:$0]  %s0, 128, %s18, [#allocation3]
    $region5: #{action_net_wrapper_forward.1} parent=1 // pred_fallthru
      _
    // Predicated region
    $region6: #{action_net_wrapper_forward.1} parent=1 // pred_check
      _
    $region7: #{action_net_wrapper_forward.1} parent=1 // pred_check_branch
      %22 = sbr.rel (0) target = $region9
    $region8: #{action_net_wrapper_forward.1} parent=1 // pred_region
      %s24 = ssub.s32 512, 512
      %25 = vsyncadd [#allocation6], %s24
      %s26 = sshll.u32 [#allocation5], 4
      %s27 = int_to_ptr.vmem [resolvable:$true] %s26
      %32 = dma.hbm_to_vmem [thread:$0]  %s1, 512, %s27, [#allocation6], 128, 128, 8
    $region9: #{action_net_wrapper_forward.1} parent=1 // pred_fallthru
      _
    // Predicated region
    $region10: #{action_net_wrapper_forward.1} parent=1 // pred_check
      _
    $region11: #{action_net_wrapper_forward.1} parent=1 // pred_check_branch
      %34 = sbr.rel (0) target = $region13
    $region12: #{action_net_wrapper_forward.1} parent=1 // pred_region
      _
    $region13: #{action_net_wrapper_forward.1} parent=1 // pred_fallthru
      _
    // Predicated region
    $region14: #{action_net_wrapper_forward.1} parent=1 // pred_check
      _
    $region15: #{action_net_wrapper_forward.1} parent=1 // pred_check_branch
      %36 = sbr.rel (0) target = $region17
    $region16: #{action_net_wrapper_forward.1} parent=1 // pred_region
      %37 = dma.done [#allocation3], 128
    $region17: #{action_net_wrapper_forward.1} parent=1 // pred_fallthru
      _
    // Predicated region
    $region18: #{action_net_wrapper_forward.1} parent=1 // pred_check
      _
    $region19: #{action_net_wrapper_forward.1} parent=1 // pred_check_branch
      %39 = sbr.rel (0) target = $region21
    $region20: #{action_net_wrapper_forward.1} parent=1 // pred_region
      %40 = dma.done [#allocation6], 512
    $region21: #{action_net_wrapper_forward.1} parent=1 // pred_fallthru
      _
    %v41 = vld [vmem:[#allocation2] sm:$0xff]
    %v42 = vld [vmem:[#allocation5] sm:$0xff]
    %v43 = vld [vmem:[#allocation5 + $0x8] sm:$0xff]
    %v44 = vld [vmem:[#allocation5 + $0x10] sm:$0xff]
    %v45 = vld [vmem:[#allocation5 + $0x18] sm:$0xff]
    %v46 = vld [vmem:[%s2] sm:$0x1]
    %v48 = vlaneseq
    %v49 = vshrl.u32 %v48, 7
    %v50 = vsub.s32 0, %v49
    %v51 = vrot.slane %v46, %v50
    %vm53 = vcmask 261120
    %v55 = vsel %vm53, %v41, 0
    %57 = vmatprep.subr.mxu0 0.0
    %58 = vmatpush1.msra.mxu0 %v42
    %59 = vmatprep.subr.mxu0 0.0
    %60 = vmatpush1.msra.mxu0 %v43
    %61 = vmatprep.subr.mxu0 0.0
    %62 = vmatpush1.msra.mxu0 %v44
    %63 = vmatprep.subr.mxu0 0.0
    %64 = vmatpush1.msra.mxu0 %v45
    %65 = vmatprep.subr.mxu0 0.0
    %66 = vmatpush1.msra.mxu0 0.0
    %67 = vmatprep.subr.mxu0 0.0
    %68 = vmatpush1.msra.mxu0 0.0
    %69 = vmatprep.subr.mxu0 0.0
    %70 = vmatpush1.msra.mxu0 0.0
    %71 = vmatprep.subr.mxu0 0.0
    %72 = vmatpush1.msra.mxu0 0.0
    %73 = vmatprep.subr.mxu0 0.0
    %74 = vmatpush1.msra.mxu0 0.0
    %75 = vmatprep.subr.mxu0 0.0
    %76 = vmatpush1.msra.mxu0 0.0
    %77 = vmatprep.subr.mxu0 0.0
    %78 = vmatpush1.msra.mxu0 0.0
    %79 = vmatprep.subr.mxu0 0.0
    %80 = vmatpush1.msra.mxu0 0.0
    %81 = vmatprep.subr.mxu0 0.0
    %82 = vmatpush1.msra.mxu0 0.0
    %83 = vmatprep.subr.mxu0 0.0
    %84 = vmatpush1.msra.mxu0 0.0
    %85 = vmatprep.subr.mxu0 0.0
    %86 = vmatpush1.msra.mxu0 0.0
    %87 = vmatprep.subr.mxu0 0.0
    %88 = vmatpush1.msra.mxu0 0.0
    %89 = vmatprep.subr.mxu0 0.0
    %90 = vmatpush1.msra.mxu0 0.0
    %91 = vmatprep.subr.mxu0 0.0
    %92 = vmatpush1.msra.mxu0 0.0
    %93 = vmatprep.subr.mxu0 0.0
    %94 = vmatpush1.msra.mxu0 0.0
    %95 = vmatprep.subr.mxu0 0.0
    %96 = vmatpush1.msra.mxu0 0.0
    %97 = vmatprep.subr.mxu0 0.0
    %98 = vmatpush1.msra.mxu0 0.0
    %99 = vmatprep.subr.mxu0 0.0
    %100 = vmatpush1.msra.mxu0 0.0
    %101 = vmatprep.subr.mxu0 0.0
    %102 = vmatpush1.msra.mxu0 0.0
    %103 = vmatprep.subr.mxu0 0.0
    %104 = vmatpush1.msra.mxu0 0.0
    %105 = vmatprep.subr.mxu0 0.0
    %106 = vmatpush1.msra.mxu0 0.0
    %107 = vmatprep.subr.mxu0 0.0
    %108 = vmatpush1.msra.mxu0 0.0
    %109 = vmatprep.subr.mxu0 0.0
    %110 = vmatpush1.msra.mxu0 0.0
    %111 = vmatprep.subr.mxu0 0.0
    %112 = vmatpush1.msra.mxu0 0.0
    %113 = vmatprep.subr.mxu0 0.0
    %114 = vmatpush1.msra.mxu0 0.0
    %115 = vmatprep.subr.mxu0 0.0
    %116 = vmatpush1.msra.mxu0 0.0
    %117 = vmatprep.subr.mxu0 0.0
    %118 = vmatpush1.msra.mxu0 0.0
    %119 = vmatprep.subr.mxu0 0.0
    %120 = vmatpush1.msra.mxu0 0.0
    %121 = vmatprep.mubr.f32.mxu0 0.0
    %122 = vmatmul.mubr.f32.gmra.mrb[0].mxu0 %v55
    %v123 = vpop.f32.mrb[0].mxu0
    %v124 = vadd.f32 %v51, %v123
    %v125 = vpop.f32.mrb[0].mxu0
    %126 = vdwg.mxu0
    %vm127 = vcmask 80896
    %128 = vst.msk [vmem:[#allocation7] sm:$0xff] %vm127, %v124
    // Predicated region
    $region22: #{action_net_wrapper_forward.1} parent=1 // pred_check
      _
    $region23: #{action_net_wrapper_forward.1} parent=1 // pred_check_branch
      %130 = sbr.rel (0) target = $region25
    $region24: #{action_net_wrapper_forward.1} parent=1 // pred_region
      %s132 = ssub.s32 128, 128
      %133 = vsyncadd [#allocation4], %s132
      %s135 = sshll.u32 [#allocation7], 4
      %s136 = int_to_ptr.vmem [resolvable:$true] %s135
      %138 = dma.vmem_to_hbm [thread:$0]  %s136, 128, %s3, [#allocation4]
    $region25: #{action_net_wrapper_forward.1} parent=1 // pred_fallthru
      _
    // Predicated region
    $region26: #{action_net_wrapper_forward.1} parent=1 // pred_check
      _
    $region27: #{action_net_wrapper_forward.1} parent=1 // pred_check_branch
      %140 = sbr.rel (0) target = $region29
    $region28: #{action_net_wrapper_forward.1} parent=1 // pred_region
      %141 = dma.done [#allocation4], 128
    $region29: #{action_net_wrapper_forward.1} parent=1 // pred_fallthru
      _
    %142 = vsyncpa [#allocation3], 1
    %143 = vsyncpa [#allocation6], 1
    %144 = vsyncpa [#allocation4], 1

</llo_original>
